<compile_context>
chip_gen: v5e
topology: v5e:2x2
jax: 0.10.0
libtpu: 0.0.40
codegen_flags: <defaults>
</compile_context>

<pallas_src>
import functools
import math

import jax
import jax.numpy as jnp
from jax.experimental import pallas as pl
from jax.experimental.pallas import tpu as pltpu


def _stable_sigmoid(x):
    # 1/(1+exp(-x)) via tanh so huge |x| (d^2/sigma with sigma=1e-5) saturates
    # to exactly 0/1 instead of producing inf.
    return 0.5 * (jnp.tanh(0.5 * x) + 1.0)


def _pixel_tables(imsize, sub_rows):
    """Pixel-center NDC coords for the 2x supersampled image.

    Returns px, py of shape (4*Q/128, 128) where Q = imsize*imsize.  Row
    ordering: global row g = t*(4*sub_rows) + s*sub_rows + k with
      t = output-pixel tile, s = subpixel (dy,dx) in {0..3}, k = row-in-tile.
    Output pixel index q = (t*sub_rows + k)*128 + lane; supersampled pixel is
    (row, col) = (2*(q//imsize) + s//2, 2*(q%imsize) + s%2).
    """
    q_total = imsize * imsize
    qr = q_total // 128
    n_rows = 4 * qr
    s2 = 2 * imsize
    g = jnp.arange(n_rows, dtype=jnp.int32)[:, None]     # (n_rows, 1)
    lane = jnp.arange(128, dtype=jnp.int32)[None, :]      # (1, 128)
    t = g // (4 * sub_rows)
    s = (g // sub_rows) % 4
    k = g % sub_rows
    q = (t * sub_rows + k) * 128 + lane                    # (n_rows, 128)
    r_out = q // imsize
    c_out = q % imsize
    row = 2 * r_out + s // 2
    col = 2 * c_out + s % 2
    px = (2.0 * col.astype(jnp.float32) + 1.0) / s2 - 1.0
    py = 1.0 - (2.0 * row.astype(jnp.float32) + 1.0) / s2  # row 0 = top, y-up
    return px, py


def _soft_raster_kernel(fpos_ref, fcol_ref, px_ref, py_ref, out_ref, *,
                        n_faces, sub_rows, sigma, gamma, near, far, bg_eps,
                        dist_eps):
    # fpos_ref / fcol_ref : SMEM (B*Nf*9,) flat per-face xyz / rgb (screen space)
    # px_ref / py_ref     : VMEM (4*sub_rows, 128) pixel-center coords
    # out_ref             : VMEM (1, 4, sub_rows, 128) pooled RGBA block
    b = pl.program_id(0)
    px = px_ref[...]
    py = py_ref[...]
    shape = px.shape

    inv_sigma = 1.0 / sigma
    inv_gamma = 1.0 / gamma
    inv_zrange = 1.0 / (far - near)
    threshold = dist_eps * sigma            # squared-distance cutoff (SoftRas)
    base = b * (n_faces * 9)

    def face_body(j, carry):
        zmax, ssum, acc_r, acc_g, acc_b, keep = carry
        o = base + j * 9
        x0 = fpos_ref[o]; y0 = fpos_ref[o + 1]; z0 = fpos_ref[o + 2]
        x1 = fpos_ref[o + 3]; y1 = fpos_ref[o + 4]; z1 = fpos_ref[o + 5]
        x2 = fpos_ref[o + 6]; y2 = fpos_ref[o + 7]; z2 = fpos_ref[o + 8]
        r0 = fcol_ref[o]; g0 = fcol_ref[o + 1]; b0 = fcol_ref[o + 2]
        r1 = fcol_ref[o + 3]; g1 = fcol_ref[o + 4]; b1 = fcol_ref[o + 5]
        r2 = fcol_ref[o + 6]; g2 = fcol_ref[o + 7]; b2 = fcol_ref[o + 8]

        # ---- per-face scalar invariants (scalar unit, once per face) ----
        e0x = x1 - x0; e0y = y1 - y0
        e1x = x2 - x1; e1y = y2 - y1
        e2x = x0 - x2; e2y = y0 - y2
        il0 = 1.0 / (e0x * e0x + e0y * e0y + 1e-12)
        il1 = 1.0 / (e1x * e1x + e1y * e1y + 1e-12)
        il2 = 1.0 / (e2x * e2x + e2y * e2y + 1e-12)
        det = (y1 - y2) * (x0 - x2) + (x2 - x1) * (y0 - y2)
        det = det + jnp.where(det >= 0.0, 1e-10, -1e-10)
        inv_det = 1.0 / det
        iz0 = 1.0 / z0; iz1 = 1.0 / z1; iz2 = 1.0 / z2

        # ---- per-pixel vector math (full (8,128)-dense slabs) ----
        dx0 = px - x0; dyy0 = py - y0
        dx1 = px - x1; dyy1 = py - y1
        dx2 = px - x2; dyy2 = py - y2

        def seg_d2(dx, dy, ex, ey, il):
            t = jnp.clip((dx * ex + dy * ey) * il, 0.0, 1.0)
            qx = dx - t * ex
            qy = dy - t * ey
            return qx * qx + qy * qy

        d2 = jnp.minimum(jnp.minimum(seg_d2(dx0, dyy0, e0x, e0y, il0),
                                     seg_d2(dx1, dyy1, e1x, e1y, il1)),
                         seg_d2(dx2, dyy2, e2x, e2y, il2))

        w0 = ((y1 - y2) * dx2 + (x2 - x1) * dyy2) * inv_det
        w1 = ((y2 - y0) * dx2 + (x0 - x2) * dyy2) * inv_det
        w2 = 1.0 - w0 - w1
        inside = (w0 >= 0.0) & (w1 >= 0.0) & (w2 >= 0.0)

        # SoftRas prunes faces with (outside AND d^2 >= dist_eps*sigma): they
        # contribute to neither alpha nor the depth softmax.  This also keeps
        # the softmax denominator bounded away from zero (no inf/NaN on
        # background pixels).
        contrib = inside | (d2 < threshold)
        sgn = jnp.where(inside, 1.0, -1.0)
        dfrag = jnp.where(contrib, _stable_sigmoid(sgn * d2 * inv_sigma), 0.0)

        # clipped barycentric weights for color/depth interpolation
        w0c = jnp.clip(w0, 0.0, 1.0)
        w1c = jnp.clip(w1, 0.0, 1.0)
        w2c = jnp.clip(w2, 0.0, 1.0)
        inv_wsum = pl.reciprocal(jnp.maximum(w0c + w1c + w2c, 1e-5),
                                 approx=True)
        w0c = w0c * inv_wsum; w1c = w1c * inv_wsum; w2c = w2c * inv_wsum

        zp = pl.reciprocal(w0c * iz0 + w1c * iz1 + w2c * iz2, approx=True)
        rgb_mask = contrib & (zp > near) & (zp < far)

        # online softmax over normalized depth (accumulators scaled by
        # exp(-zmax/gamma)); background term is the initial ssum=1 at
        # zmax=bg_eps, background color = 0.
        zn = jnp.where(rgb_mask, (far - zp) * inv_zrange, 0.0)
        new_zmax = jnp.where(rgb_mask, jnp.maximum(zmax, zn), zmax)
        rescale = jnp.exp((zmax - new_zmax) * inv_gamma)
        ez = jnp.where(rgb_mask, jnp.exp((zn - new_zmax) * inv_gamma), 0.0)
        ez = ez * dfrag

        cr = w0c * r0 + w1c * r1 + w2c * r2
        cg = w0c * g0 + w1c * g1 + w2c * g2
        cb = w0c * b0 + w1c * b1 + w2c * b2

        ssum = ssum * rescale + ez
        acc_r = acc_r * rescale + ez * cr
        acc_g = acc_g * rescale + ez * cg
        acc_b = acc_b * rescale + ez * cb
        keep = keep * (1.0 - dfrag)          # aggr_func_alpha='prod'
        return new_zmax, ssum, acc_r, acc_g, acc_b, keep

    init = (jnp.full(shape, bg_eps, jnp.float32),   # zmax
            jnp.ones(shape, jnp.float32),           # ssum (background term)
            jnp.zeros(shape, jnp.float32),          # acc_r (bg color = 0)
            jnp.zeros(shape, jnp.float32),          # acc_g
            jnp.zeros(shape, jnp.float32),          # acc_b
            jnp.ones(shape, jnp.float32))           # prod(1 - D)
    _, ssum, acc_r, acc_g, acc_b, keep = jax.lax.fori_loop(
        0, n_faces, face_body, init)

    inv = pl.reciprocal(ssum, approx=True)
    tq = sub_rows

    def pool(x):   # fused 2x2 anti-alias average over the 4 subpixel groups
        return (x[0:tq] + x[tq:2 * tq] + x[2 * tq:3 * tq]
                + x[3 * tq:4 * tq]) * 0.25

    out_ref[0, 0] = pool(acc_r * inv)
    out_ref[0, 1] = pool(acc_g * inv)
    out_ref[0, 2] = pool(acc_b * inv)
    out_ref[0, 3] = pool(1.0 - keep)


def soft_rasterize(face_pos, face_col, *, imsize, sigma, gamma, dist_eps,
                   near=0.05, far=100.0, bg_eps=1e-3):
    """face_pos/face_col: (B, Nf, 9) f32.  Returns (B, 4, imsize, imsize)."""
    b, nf = face_pos.shape[0], face_pos.shape[1]
    q_total = imsize * imsize
    assert q_total % 128 == 0, "imsize^2 must be a multiple of 128 (e.g. 16, 32)"
    qr = q_total // 128
    tqr = next(c for c in (4, 2, 1) if qr % c == 0)   # rows of output pixels/tile
    n_tiles = qr // tqr

    px_tab, py_tab = _pixel_tables(imsize, tqr)        # (4*qr, 128) each

    fpos1d = face_pos.reshape(b * nf * 9).astype(jnp.float32)
    fcol1d = face_col.reshape(b * nf * 9).astype(jnp.float32)

    kernel = functools.partial(
        _soft_raster_kernel, n_faces=nf, sub_rows=tqr,
        sigma=float(sigma), gamma=float(gamma), near=float(near),
        far=float(far), bg_eps=float(bg_eps), dist_eps=float(dist_eps))

    out = pl.pallas_call(
        kernel,
        out_shape=jax.ShapeDtypeStruct((b, 4, qr, 128), jnp.float32),
        grid_spec=pltpu.PrefetchScalarGridSpec(
            num_scalar_prefetch=0,
            grid=(b, n_tiles),
            in_specs=[
                pl.BlockSpec(memory_space=pltpu.MemorySpace.SMEM),   # fpos 1-D
                pl.BlockSpec(memory_space=pltpu.MemorySpace.SMEM),   # fcol 1-D
                pl.BlockSpec((4 * tqr, 128), lambda bi, ti: (ti, 0)),
                pl.BlockSpec((4 * tqr, 128), lambda bi, ti: (ti, 0)),
            ],
            out_specs=pl.BlockSpec((1, 4, tqr, 128),
                                   lambda bi, ti: (bi, 0, ti, 0)),
        ),
        compiler_params=pltpu.CompilerParams(
            dimension_semantics=("parallel", "parallel")),
    )(fpos1d, fcol1d, px_tab, py_tab)

    return out.reshape(b, 4, imsize, imsize)


# ----------------------------- JAX glue ------------------------------------


def look_at_transform(vertices, eye, at, up):
    """camera_mode='look_at': rotate vertices into camera frame."""
    z_axis = at - eye
    z_axis = z_axis / (jnp.linalg.norm(z_axis) + 1e-5)
    x_axis = jnp.cross(up, z_axis)
    x_axis = x_axis / (jnp.linalg.norm(x_axis) + 1e-5)
    y_axis = jnp.cross(z_axis, x_axis)
    r = jnp.stack([x_axis, y_axis, z_axis], axis=0)   # rows = camera axes
    return jnp.matmul(vertices - eye[None, None, :], r.T)


def perspective_transform(vertices, angle_deg=30.0):
    # TODO(synk): no guard for vertices at/behind the camera (z<=0); fine for
    # the default look_at camera used here.
    width = math.tan(math.radians(angle_deg))
    z = vertices[..., 2]
    x = vertices[..., 0] / (z * width)
    y = vertices[..., 1] / (z * width)
    return jnp.stack([x, y, z], axis=-1)


def sr_renderer_forward(V, F, T, *, imsize=16, eye=None,
                        sigma_val=1e-5, gamma_val=1e-4, dist_eps=1e-4):
    """Equivalent of SrRenderer.forward(V, F, T) -> (B, 4, imsize, imsize).

    V: (B, Nv, 3) f32 vertices; F: (B, Nf, 3) i32 faces; T: (B, Nv, 3) f32
    per-vertex colors (texture_type='vertex').  Lighting: ambient=1.0,
    directional=0.0 -> colors pass through unchanged.  anti_aliasing=True is
    realized as 2x supersampling with the 2x2 average pool fused in-kernel.
    """
    # TODO(synk): SoftRas fill_back backface duplication + front-side texture
    # check are omitted; for closed meshes the rendered RGB is unchanged (only
    # edge alpha differs slightly).
    assert V.shape[0] == F.shape[0] and T.shape[0] == V.shape[0]
    b = V.shape[0]
    if eye is None:
        # SoftRas LookAt default eye for viewing_angle=30
        eye = jnp.array(
            [0.0, 0.0, -(1.0 / math.tan(math.radians(30.0)) + 1.0)],
            jnp.float32)
    at = jnp.array([0.0, 0.0, 0.0], jnp.float32)
    up = jnp.array([0.0, 1.0, 0.0], jnp.float32)

    v_cam = look_at_transform(V.astype(jnp.float32), eye, at, up)
    v_scr = perspective_transform(v_cam)                      # (B, Nv, 3)

    fpos = jax.vmap(lambda v, f: v[f])(v_scr, F)               # (B, Nf, 3, 3)
    fcol = jax.vmap(lambda t, f: t[f])(T.astype(jnp.float32), F)

    nf = F.shape[1]
    return soft_rasterize(
        fpos.reshape(b, nf, 9), fcol.reshape(b, nf, 9),
        imsize=imsize, sigma=sigma_val, gamma=gamma_val, dist_eps=dist_eps)


if __name__ == "__main__":
    key = jax.random.PRNGKey(0)
    imsize = 16
    B = 2

    cube_v = jnp.array(
        [[-0.5, -0.5, -0.5], [0.5, -0.5, -0.5], [0.5, 0.5, -0.5],
         [-0.5, 0.5, -0.5], [-0.5, -0.5, 0.5], [0.5, -0.5, 0.5],
         [0.5, 0.5, 0.5], [-0.5, 0.5, 0.5]], jnp.float32)
    cube_f = jnp.array(
        [[0, 1, 2], [0, 2, 3], [4, 6, 5], [4, 7, 6],
         [0, 4, 5], [0, 5, 1], [3, 2, 6], [3, 6, 7],
         [0, 3, 7], [0, 7, 4], [1, 5, 6], [1, 6, 2]], jnp.int32)

    k1, k2 = jax.random.split(key)
    V = jnp.stack([cube_v,
                   cube_v * 0.8 + 0.05 * jax.random.normal(k1, cube_v.shape)])
    F = jnp.stack([cube_f, cube_f])
    T = jax.random.uniform(k2, (B, cube_v.shape[0], 3), jnp.float32)

    img = sr_renderer_forward(V, F, T, imsize=imsize,
                              sigma_val=1e-5, gamma_val=1e-4)
    img = jax.block_until_ready(img)

    assert img.shape == (B, 4, imsize, imsize), img.shape
    assert bool(jnp.all(jnp.isfinite(img)))
    print("KERNEL_OK")
</pallas_src>

<mosaic_0001>
module attributes {stable_mosaic.version = 11 : i64} {
  func.func @_soft_raster_kernel(%arg0: i32, %arg1: i32, %arg2: memref<216xf32, #tpu.memory_space<smem>>, %arg3: memref<216xf32, #tpu.memory_space<smem>>, %arg4: memref<8x128xf32, #tpu.memory_space<vmem>>, %arg5: memref<8x128xf32, #tpu.memory_space<vmem>>, %arg6: memref<1x4x2x128xf32, #tpu.memory_space<vmem>>) attributes {dimension_semantics = [#tpu.dimension_semantics<parallel>, #tpu.dimension_semantics<parallel>], iteration_bounds = array<i64: 2, 1>, scalar_prefetch = 0 : i64, scratch_operands = 0 : i64, tpu.core_type = #tpu.core_type<tc>, window_params = [{transform_indices = @transform_0, window_bounds = array<i64: 216>}, {transform_indices = @transform_1, window_bounds = array<i64: 216>}, {transform_indices = @transform_2, window_bounds = array<i64: 8, 128>}, {transform_indices = @transform_3, window_bounds = array<i64: 8, 128>}, {transform_indices = @transform_4, window_bounds = array<i64: 1, 4, 2, 128>}]} {
    %c0 = arith.constant 0 : index
    %c0_0 = arith.constant 0 : index
    %0 = vector.load %arg4[%c0, %c0_0] : memref<8x128xf32, #tpu.memory_space<vmem>>, vector<8x128xf32>
    %c0_1 = arith.constant 0 : index
    %c0_2 = arith.constant 0 : index
    %1 = vector.load %arg5[%c0_1, %c0_2] : memref<8x128xf32, #tpu.memory_space<vmem>>, vector<8x128xf32>
    %c108_i32 = arith.constant 108 : i32
    %2 = arith.muli %arg0, %c108_i32 : i32
    %cst = arith.constant 1.000000e-03 : f32
    %3 = vector.broadcast %cst : f32 to vector<8x128xf32>
    %cst_3 = arith.constant 1.000000e+00 : f32
    %4 = vector.broadcast %cst_3 : f32 to vector<8x128xf32>
    %cst_4 = arith.constant 0.000000e+00 : f32
    %5 = vector.broadcast %cst_4 : f32 to vector<8x128xf32>
    %cst_5 = arith.constant 0.000000e+00 : f32
    %6 = vector.broadcast %cst_5 : f32 to vector<8x128xf32>
    %cst_6 = arith.constant 0.000000e+00 : f32
    %7 = vector.broadcast %cst_6 : f32 to vector<8x128xf32>
    %cst_7 = arith.constant 1.000000e+00 : f32
    %8 = vector.broadcast %cst_7 : f32 to vector<8x128xf32>
    %c0_i32 = arith.constant 0 : i32
    %c12_i32 = arith.constant 12 : i32
    %9 = arith.addi %c0_i32, %c12_i32 : i32
    %c1_i32 = arith.constant 1 : i32
    %10:6 = scf.for %arg7 = %c0_i32 to %9 step %c1_i32 iter_args(%arg8 = %3, %arg9 = %4, %arg10 = %5, %arg11 = %6, %arg12 = %7, %arg13 = %8) -> (vector<8x128xf32>, vector<8x128xf32>, vector<8x128xf32>, vector<8x128xf32>, vector<8x128xf32>, vector<8x128xf32>)  : i32 {
      %c9_i32 = arith.constant 9 : i32
      %65 = arith.muli %arg7, %c9_i32 : i32
      %66 = arith.addi %2, %65 : i32
      %67 = arith.index_cast %66 : i32 to index
      %68 = memref.load %arg2[%67] : memref<216xf32, #tpu.memory_space<smem>>
      %c1_i32_27 = arith.constant 1 : i32
      %69 = arith.addi %66, %c1_i32_27 : i32
      %70 = arith.index_cast %69 : i32 to index
      %71 = memref.load %arg2[%70] : memref<216xf32, #tpu.memory_space<smem>>
      %c2_i32 = arith.constant 2 : i32
      %72 = arith.addi %66, %c2_i32 : i32
      %73 = arith.index_cast %72 : i32 to index
      %74 = memref.load %arg2[%73] : memref<216xf32, #tpu.memory_space<smem>>
      %c3_i32 = arith.constant 3 : i32
      %75 = arith.addi %66, %c3_i32 : i32
      %76 = arith.index_cast %75 : i32 to index
      %77 = memref.load %arg2[%76] : memref<216xf32, #tpu.memory_space<smem>>
      %c4_i32 = arith.constant 4 : i32
      %78 = arith.addi %66, %c4_i32 : i32
      %79 = arith.index_cast %78 : i32 to index
      %80 = memref.load %arg2[%79] : memref<216xf32, #tpu.memory_space<smem>>
      %c5_i32 = arith.constant 5 : i32
      %81 = arith.addi %66, %c5_i32 : i32
      %82 = arith.index_cast %81 : i32 to index
      %83 = memref.load %arg2[%82] : memref<216xf32, #tpu.memory_space<smem>>
      %c6_i32 = arith.constant 6 : i32
      %84 = arith.addi %66, %c6_i32 : i32
      %85 = arith.index_cast %84 : i32 to index
      %86 = memref.load %arg2[%85] : memref<216xf32, #tpu.memory_space<smem>>
      %c7_i32 = arith.constant 7 : i32
      %87 = arith.addi %66, %c7_i32 : i32
      %88 = arith.index_cast %87 : i32 to index
      %89 = memref.load %arg2[%88] : memref<216xf32, #tpu.memory_space<smem>>
      %c8_i32 = arith.constant 8 : i32
      %90 = arith.addi %66, %c8_i32 : i32
      %91 = arith.index_cast %90 : i32 to index
      %92 = memref.load %arg2[%91] : memref<216xf32, #tpu.memory_space<smem>>
      %93 = arith.index_cast %66 : i32 to index
      %94 = memref.load %arg3[%93] : memref<216xf32, #tpu.memory_space<smem>>
      %c1_i32_28 = arith.constant 1 : i32
      %95 = arith.addi %66, %c1_i32_28 : i32
      %96 = arith.index_cast %95 : i32 to index
      %97 = memref.load %arg3[%96] : memref<216xf32, #tpu.memory_space<smem>>
      %c2_i32_29 = arith.constant 2 : i32
      %98 = arith.addi %66, %c2_i32_29 : i32
      %99 = arith.index_cast %98 : i32 to index
      %100 = memref.load %arg3[%99] : memref<216xf32, #tpu.memory_space<smem>>
      %c3_i32_30 = arith.constant 3 : i32
      %101 = arith.addi %66, %c3_i32_30 : i32
      %102 = arith.index_cast %101 : i32 to index
      %103 = memref.load %arg3[%102] : memref<216xf32, #tpu.memory_space<smem>>
      %c4_i32_31 = arith.constant 4 : i32
      %104 = arith.addi %66, %c4_i32_31 : i32
      %105 = arith.index_cast %104 : i32 to index
      %106 = memref.load %arg3[%105] : memref<216xf32, #tpu.memory_space<smem>>
      %c5_i32_32 = arith.constant 5 : i32
      %107 = arith.addi %66, %c5_i32_32 : i32
      %108 = arith.index_cast %107 : i32 to index
      %109 = memref.load %arg3[%108] : memref<216xf32, #tpu.memory_space<smem>>
      %c6_i32_33 = arith.constant 6 : i32
      %110 = arith.addi %66, %c6_i32_33 : i32
      %111 = arith.index_cast %110 : i32 to index
      %112 = memref.load %arg3[%111] : memref<216xf32, #tpu.memory_space<smem>>
      %c7_i32_34 = arith.constant 7 : i32
      %113 = arith.addi %66, %c7_i32_34 : i32
      %114 = arith.index_cast %113 : i32 to index
      %115 = memref.load %arg3[%114] : memref<216xf32, #tpu.memory_space<smem>>
      %c8_i32_35 = arith.constant 8 : i32
      %116 = arith.addi %66, %c8_i32_35 : i32
      %117 = arith.index_cast %116 : i32 to index
      %118 = memref.load %arg3[%117] : memref<216xf32, #tpu.memory_space<smem>>
      %119 = arith.subf %77, %68 : f32
      %120 = arith.subf %80, %71 : f32
      %121 = arith.subf %86, %77 : f32
      %122 = arith.subf %89, %80 : f32
      %123 = arith.subf %68, %86 : f32
      %124 = arith.subf %71, %89 : f32
      %125 = arith.mulf %119, %119 : f32
      %126 = arith.mulf %120, %120 : f32
      %127 = arith.addf %125, %126 : f32
      %cst_36 = arith.constant 9.99999996E-13 : f32
      %128 = arith.addf %127, %cst_36 : f32
      %cst_37 = arith.constant 1.000000e+00 : f32
      %129 = arith.divf %cst_37, %128 : f32
      %130 = arith.mulf %121, %121 : f32
      %131 = arith.mulf %122, %122 : f32
      %132 = arith.addf %130, %131 : f32
      %cst_38 = arith.constant 9.99999996E-13 : f32
      %133 = arith.addf %132, %cst_38 : f32
      %cst_39 = arith.constant 1.000000e+00 : f32
      %134 = arith.divf %cst_39, %133 : f32
      %135 = arith.mulf %123, %123 : f32
      %136 = arith.mulf %124, %124 : f32
      %137 = arith.addf %135, %136 : f32
      %cst_40 = arith.constant 9.99999996E-13 : f32
      %138 = arith.addf %137, %cst_40 : f32
      %cst_41 = arith.constant 1.000000e+00 : f32
      %139 = arith.divf %cst_41, %138 : f32
      %140 = arith.subf %80, %89 : f32
      %141 = arith.subf %68, %86 : f32
      %142 = arith.mulf %140, %141 : f32
      %143 = arith.subf %86, %77 : f32
      %144 = arith.subf %71, %89 : f32
      %145 = arith.mulf %143, %144 : f32
      %146 = arith.addf %142, %145 : f32
      %cst_42 = arith.constant 0.000000e+00 : f32
      %147 = arith.cmpf oge, %146, %cst_42 : f32
      %cst_43 = arith.constant 1.000000e-10 : f32
      %cst_44 = arith.constant -1.000000e-10 : f32
      %148 = arith.select %147, %cst_43, %cst_44 : f32
      %149 = arith.addf %146, %148 : f32
      %cst_45 = arith.constant 1.000000e+00 : f32
      %150 = arith.divf %cst_45, %149 : f32
      %cst_46 = arith.constant 1.000000e+00 : f32
      %151 = arith.divf %cst_46, %74 : f32
      %cst_47 = arith.constant 1.000000e+00 : f32
      %152 = arith.divf %cst_47, %83 : f32
      %cst_48 = arith.constant 1.000000e+00 : f32
      %153 = arith.divf %cst_48, %92 : f32
      %154 = vector.broadcast %68 : f32 to vector<8x128xf32>
      %155 = arith.subf %0, %154 : vector<8x128xf32>
      %156 = vector.broadcast %71 : f32 to vector<8x128xf32>
      %157 = arith.subf %1, %156 : vector<8x128xf32>
      %158 = vector.broadcast %77 : f32 to vector<8x128xf32>
      %159 = arith.subf %0, %158 : vector<8x128xf32>
      %160 = vector.broadcast %80 : f32 to vector<8x128xf32>
      %161 = arith.subf %1, %160 : vector<8x128xf32>
      %162 = vector.broadcast %86 : f32 to vector<8x128xf32>
      %163 = arith.subf %0, %162 : vector<8x128xf32>
      %164 = vector.broadcast %89 : f32 to vector<8x128xf32>
      %165 = arith.subf %1, %164 : vector<8x128xf32>
      %166 = vector.broadcast %119 : f32 to vector<8x128xf32>
      %167 = arith.mulf %155, %166 : vector<8x128xf32>
      %168 = vector.broadcast %120 : f32 to vector<8x128xf32>
      %169 = arith.mulf %157, %168 : vector<8x128xf32>
      %170 = arith.addf %167, %169 : vector<8x128xf32>
      %171 = vector.broadcast %129 : f32 to vector<8x128xf32>
      %172 = arith.mulf %170, %171 : vector<8x128xf32>
      %cst_49 = arith.constant 0.000000e+00 : f32
      %cst_50 = arith.constant 1.000000e+00 : f32
      %173 = vector.broadcast %cst_49 : f32 to vector<8x128xf32>
      %174 = arith.maximumf %173, %172 : vector<8x128xf32>
      %175 = vector.broadcast %cst_50 : f32 to vector<8x128xf32>
      %176 = arith.minimumf %175, %174 : vector<8x128xf32>
      %177 = vector.broadcast %119 : f32 to vector<8x128xf32>
      %178 = arith.mulf %176, %177 : vector<8x128xf32>
      %179 = arith.subf %155, %178 : vector<8x128xf32>
      %180 = vector.broadcast %120 : f32 to vector<8x128xf32>
      %181 = arith.mulf %176, %180 : vector<8x128xf32>
      %182 = arith.subf %157, %181 : vector<8x128xf32>
      %183 = arith.mulf %179, %179 : vector<8x128xf32>
      %184 = arith.mulf %182, %182 : vector<8x128xf32>
      %185 = arith.addf %183, %184 : vector<8x128xf32>
      %186 = vector.broadcast %121 : f32 to vector<8x128xf32>
      %187 = arith.mulf %159, %186 : vector<8x128xf32>
      %188 = vector.broadcast %122 : f32 to vector<8x128xf32>
      %189 = arith.mulf %161, %188 : vector<8x128xf32>
      %190 = arith.addf %187, %189 : vector<8x128xf32>
      %191 = vector.broadcast %134 : f32 to vector<8x128xf32>
      %192 = arith.mulf %190, %191 : vector<8x128xf32>
      %cst_51 = arith.constant 0.000000e+00 : f32
      %cst_52 = arith.constant 1.000000e+00 : f32
      %193 = vector.broadcast %cst_51 : f32 to vector<8x128xf32>
      %194 = arith.maximumf %193, %192 : vector<8x128xf32>
      %195 = vector.broadcast %cst_52 : f32 to vector<8x128xf32>
      %196 = arith.minimumf %195, %194 : vector<8x128xf32>
      %197 = vector.broadcast %121 : f32 to vector<8x128xf32>
      %198 = arith.mulf %196, %197 : vector<8x128xf32>
      %199 = arith.subf %159, %198 : vector<8x128xf32>
      %200 = vector.broadcast %122 : f32 to vector<8x128xf32>
      %201 = arith.mulf %196, %200 : vector<8x128xf32>
      %202 = arith.subf %161, %201 : vector<8x128xf32>
      %203 = arith.mulf %199, %199 : vector<8x128xf32>
      %204 = arith.mulf %202, %202 : vector<8x128xf32>
      %205 = arith.addf %203, %204 : vector<8x128xf32>
      %206 = arith.minimumf %185, %205 : vector<8x128xf32>
      %207 = vector.broadcast %123 : f32 to vector<8x128xf32>
      %208 = arith.mulf %163, %207 : vector<8x128xf32>
      %209 = vector.broadcast %124 : f32 to vector<8x128xf32>
      %210 = arith.mulf %165, %209 : vector<8x128xf32>
      %211 = arith.addf %208, %210 : vector<8x128xf32>
      %212 = vector.broadcast %139 : f32 to vector<8x128xf32>
      %213 = arith.mulf %211, %212 : vector<8x128xf32>
      %cst_53 = arith.constant 0.000000e+00 : f32
      %cst_54 = arith.constant 1.000000e+00 : f32
      %214 = vector.broadcast %cst_53 : f32 to vector<8x128xf32>
      %215 = arith.maximumf %214, %213 : vector<8x128xf32>
      %216 = vector.broadcast %cst_54 : f32 to vector<8x128xf32>
      %217 = arith.minimumf %216, %215 : vector<8x128xf32>
      %218 = vector.broadcast %123 : f32 to vector<8x128xf32>
      %219 = arith.mulf %217, %218 : vector<8x128xf32>
      %220 = arith.subf %163, %219 : vector<8x128xf32>
      %221 = vector.broadcast %124 : f32 to vector<8x128xf32>
      %222 = arith.mulf %217, %221 : vector<8x128xf32>
      %223 = arith.subf %165, %222 : vector<8x128xf32>
      %224 = arith.mulf %220, %220 : vector<8x128xf32>
      %225 = arith.mulf %223, %223 : vector<8x128xf32>
      %226 = arith.addf %224, %225 : vector<8x128xf32>
      %227 = arith.minimumf %206, %226 : vector<8x128xf32>
      %228 = arith.subf %80, %89 : f32
      %229 = vector.broadcast %228 : f32 to vector<8x128xf32>
      %230 = arith.mulf %229, %163 : vector<8x128xf32>
      %231 = arith.subf %86, %77 : f32
      %232 = vector.broadcast %231 : f32 to vector<8x128xf32>
      %233 = arith.mulf %232, %165 : vector<8x128xf32>
      %234 = arith.addf %230, %233 : vector<8x128xf32>
      %235 = vector.broadcast %150 : f32 to vector<8x128xf32>
      %236 = arith.mulf %234, %235 : vector<8x128xf32>
      %237 = arith.subf %89, %71 : f32
      %238 = vector.broadcast %237 : f32 to vector<8x128xf32>
      %239 = arith.mulf %238, %163 : vector<8x128xf32>
      %240 = arith.subf %68, %86 : f32
      %241 = vector.broadcast %240 : f32 to vector<8x128xf32>
      %242 = arith.mulf %241, %165 : vector<8x128xf32>
      %243 = arith.addf %239, %242 : vector<8x128xf32>
      %244 = vector.broadcast %150 : f32 to vector<8x128xf32>
      %245 = arith.mulf %243, %244 : vector<8x128xf32>
      %cst_55 = arith.constant 1.000000e+00 : f32
      %246 = vector.broadcast %cst_55 : f32 to vector<8x128xf32>
      %247 = arith.subf %246, %236 : vector<8x128xf32>
      %248 = arith.subf %247, %245 : vector<8x128xf32>
      %cst_56 = arith.constant 0.000000e+00 : f32
      %249 = vector.broadcast %cst_56 : f32 to vector<8x128xf32>
      %250 = arith.cmpf oge, %236, %249 : vector<8x128xf32>
      %cst_57 = arith.constant 0.000000e+00 : f32
      %251 = vector.broadcast %cst_57 : f32 to vector<8x128xf32>
      %252 = arith.cmpf oge, %245, %251 : vector<8x128xf32>
      %253 = arith.andi %250, %252 : vector<8x128xi1>
      %cst_58 = arith.constant 0.000000e+00 : f32
      %254 = vector.broadcast %cst_58 : f32 to vector<8x128xf32>
      %255 = arith.cmpf oge, %248, %254 : vector<8x128xf32>
      %256 = arith.andi %253, %255 : vector<8x128xi1>
      %cst_59 = arith.constant 9.99999971E-10 : f32
      %257 = vector.broadcast %cst_59 : f32 to vector<8x128xf32>
      %258 = arith.cmpf olt, %227, %257 : vector<8x128xf32>
      %259 = arith.ori %256, %258 : vector<8x128xi1>
      %cst_60 = arith.constant 1.000000e+00 : f32
      %cst_61 = arith.constant -1.000000e+00 : f32
      %260 = vector.broadcast %cst_60 : f32 to vector<8x128xf32>
      %261 = vector.broadcast %cst_61 : f32 to vector<8x128xf32>
      %262 = arith.select %256, %260, %261 : vector<8x128xi1>, vector<8x128xf32>
      %263 = arith.mulf %262, %227 : vector<8x128xf32>
      %cst_62 = arith.constant 1.000000e+05 : f32
      %264 = vector.broadcast %cst_62 : f32 to vector<8x128xf32>
      %265 = arith.mulf %263, %264 : vector<8x128xf32>
      %cst_63 = arith.constant 5.000000e-01 : f32
      %266 = vector.broadcast %cst_63 : f32 to vector<8x128xf32>
      %267 = arith.mulf %266, %265 : vector<8x128xf32>
      %268 = math.tanh %267 : vector<8x128xf32>
      %cst_64 = arith.constant 1.000000e+00 : f32
      %269 = vector.broadcast %cst_64 : f32 to vector<8x128xf32>
      %270 = arith.addf %268, %269 : vector<8x128xf32>
      %cst_65 = arith.constant 5.000000e-01 : f32
      %271 = vector.broadcast %cst_65 : f32 to vector<8x128xf32>
      %272 = arith.mulf %271, %270 : vector<8x128xf32>
      %cst_66 = arith.constant 0.000000e+00 : f32
      %273 = vector.broadcast %cst_66 : f32 to vector<8x128xf32>
      %274 = arith.select %259, %272, %273 : vector<8x128xi1>, vector<8x128xf32>
      %cst_67 = arith.constant 0.000000e+00 : f32
      %cst_68 = arith.constant 1.000000e+00 : f32
      %275 = vector.broadcast %cst_67 : f32 to vector<8x128xf32>
      %276 = arith.maximumf %275, %236 : vector<8x128xf32>
      %277 = vector.broadcast %cst_68 : f32 to vector<8x128xf32>
      %278 = arith.minimumf %277, %276 : vector<8x128xf32>
      %cst_69 = arith.constant 0.000000e+00 : f32
      %cst_70 = arith.constant 1.000000e+00 : f32
      %279 = vector.broadcast %cst_69 : f32 to vector<8x128xf32>
      %280 = arith.maximumf %279, %245 : vector<8x128xf32>
      %281 = vector.broadcast %cst_70 : f32 to vector<8x128xf32>
      %282 = arith.minimumf %281, %280 : vector<8x128xf32>
      %cst_71 = arith.constant 0.000000e+00 : f32
      %cst_72 = arith.constant 1.000000e+00 : f32
      %283 = vector.broadcast %cst_71 : f32 to vector<8x128xf32>
      %284 = arith.maximumf %283, %248 : vector<8x128xf32>
      %285 = vector.broadcast %cst_72 : f32 to vector<8x128xf32>
      %286 = arith.minimumf %285, %284 : vector<8x128xf32>
      %287 = arith.addf %278, %282 : vector<8x128xf32>
      %288 = arith.addf %287, %286 : vector<8x128xf32>
      %cst_73 = arith.constant 9.99999974E-6 : f32
      %289 = vector.broadcast %cst_73 : f32 to vector<8x128xf32>
      %290 = arith.maximumf %288, %289 : vector<8x128xf32>
      %291 = tpu.reciprocal %290 {approx = true} : vector<8x128xf32> -> vector<8x128xf32>
      %292 = arith.mulf %278, %291 : vector<8x128xf32>
      %293 = arith.mulf %282, %291 : vector<8x128xf32>
      %294 = arith.mulf %286, %291 : vector<8x128xf32>
      %295 = vector.broadcast %151 : f32 to vector<8x128xf32>
      %296 = arith.mulf %292, %295 : vector<8x128xf32>
      %297 = vector.broadcast %152 : f32 to vector<8x128xf32>
      %298 = arith.mulf %293, %297 : vector<8x128xf32>
      %299 = arith.addf %296, %298 : vector<8x128xf32>
      %300 = vector.broadcast %153 : f32 to vector<8x128xf32>
      %301 = arith.mulf %294, %300 : vector<8x128xf32>
      %302 = arith.addf %299, %301 : vector<8x128xf32>
      %303 = tpu.reciprocal %302 {approx = true} : vector<8x128xf32> -> vector<8x128xf32>
      %cst_74 = arith.constant 5.000000e-02 : f32
      %304 = vector.broadcast %cst_74 : f32 to vector<8x128xf32>
      %305 = arith.cmpf ogt, %303, %304 : vector<8x128xf32>
      %306 = arith.andi %259, %305 : vector<8x128xi1>
      %cst_75 = arith.constant 1.000000e+02 : f32
      %307 = vector.broadcast %cst_75 : f32 to vector<8x128xf32>
      %308 = arith.cmpf olt, %303, %307 : vector<8x128xf32>
      %309 = arith.andi %306, %308 : vector<8x128xi1>
      %cst_76 = arith.constant 1.000000e+02 : f32
      %310 = vector.broadcast %cst_76 : f32 to vector<8x128xf32>
      %311 = arith.subf %310, %303 : vector<8x128xf32>
      %cst_77 = arith.constant 0.0100050028 : f32
      %312 = vector.broadcast %cst_77 : f32 to vector<8x128xf32>
      %313 = arith.mulf %311, %312 : vector<8x128xf32>
      %cst_78 = arith.constant 0.000000e+00 : f32
      %314 = vector.broadcast %cst_78 : f32 to vector<8x128xf32>
      %315 = arith.select %309, %313, %314 : vector<8x128xi1>, vector<8x128xf32>
      %316 = arith.maximumf %arg8, %315 : vector<8x128xf32>
      %317 = arith.select %309, %316, %arg8 : vector<8x128xi1>, vector<8x128xf32>
      %318 = arith.subf %arg8, %317 : vector<8x128xf32>
      %cst_79 = arith.constant 1.000000e+04 : f32
      %319 = vector.broadcast %cst_79 : f32 to vector<8x128xf32>
      %320 = arith.mulf %318, %319 : vector<8x128xf32>
      %321 = math.exp %320 : vector<8x128xf32>
      %322 = arith.subf %315, %317 : vector<8x128xf32>
      %cst_80 = arith.constant 1.000000e+04 : f32
      %323 = vector.broadcast %cst_80 : f32 to vector<8x128xf32>
      %324 = arith.mulf %322, %323 : vector<8x128xf32>
      %325 = math.exp %324 : vector<8x128xf32>
      %cst_81 = arith.constant 0.000000e+00 : f32
      %326 = vector.broadcast %cst_81 : f32 to vector<8x128xf32>
      %327 = arith.select %309, %325, %326 : vector<8x128xi1>, vector<8x128xf32>
      %328 = arith.mulf %327, %274 : vector<8x128xf32>
      %329 = vector.broadcast %94 : f32 to vector<8x128xf32>
      %330 = arith.mulf %292, %329 : vector<8x128xf32>
      %331 = vector.broadcast %103 : f32 to vector<8x128xf32>
      %332 = arith.mulf %293, %331 : vector<8x128xf32>
      %333 = arith.addf %330, %332 : vector<8x128xf32>
      %334 = vector.broadcast %112 : f32 to vector<8x128xf32>
      %335 = arith.mulf %294, %334 : vector<8x128xf32>
      %336 = arith.addf %333, %335 : vector<8x128xf32>
      %337 = vector.broadcast %97 : f32 to vector<8x128xf32>
      %338 = arith.mulf %292, %337 : vector<8x128xf32>
      %339 = vector.broadcast %106 : f32 to vector<8x128xf32>
      %340 = arith.mulf %293, %339 : vector<8x128xf32>
      %341 = arith.addf %338, %340 : vector<8x128xf32>
      %342 = vector.broadcast %115 : f32 to vector<8x128xf32>
      %343 = arith.mulf %294, %342 : vector<8x128xf32>
      %344 = arith.addf %341, %343 : vector<8x128xf32>
      %345 = vector.broadcast %100 : f32 to vector<8x128xf32>
      %346 = arith.mulf %292, %345 : vector<8x128xf32>
      %347 = vector.broadcast %109 : f32 to vector<8x128xf32>
      %348 = arith.mulf %293, %347 : vector<8x128xf32>
      %349 = arith.addf %346, %348 : vector<8x128xf32>
      %350 = vector.broadcast %118 : f32 to vector<8x128xf32>
      %351 = arith.mulf %294, %350 : vector<8x128xf32>
      %352 = arith.addf %349, %351 : vector<8x128xf32>
      %353 = arith.mulf %arg9, %321 : vector<8x128xf32>
      %354 = arith.addf %353, %328 : vector<8x128xf32>
      %355 = arith.mulf %arg10, %321 : vector<8x128xf32>
      %356 = arith.mulf %328, %336 : vector<8x128xf32>
      %357 = arith.addf %355, %356 : vector<8x128xf32>
      %358 = arith.mulf %arg11, %321 : vector<8x128xf32>
      %359 = arith.mulf %328, %344 : vector<8x128xf32>
      %360 = arith.addf %358, %359 : vector<8x128xf32>
      %361 = arith.mulf %arg12, %321 : vector<8x128xf32>
      %362 = arith.mulf %328, %352 : vector<8x128xf32>
      %363 = arith.addf %361, %362 : vector<8x128xf32>
      %cst_82 = arith.constant 1.000000e+00 : f32
      %364 = vector.broadcast %cst_82 : f32 to vector<8x128xf32>
      %365 = arith.subf %364, %274 : vector<8x128xf32>
      %366 = arith.mulf %arg13, %365 : vector<8x128xf32>
      scf.yield %317, %354, %357, %360, %363, %366 : vector<8x128xf32>, vector<8x128xf32>, vector<8x128xf32>, vector<8x128xf32>, vector<8x128xf32>, vector<8x128xf32>
    }
    %c12_i32_8 = arith.constant 12 : i32
    %11 = tpu.reciprocal %10#1 {approx = true} : vector<8x128xf32> -> vector<8x128xf32>
    %12 = arith.mulf %10#2, %11 : vector<8x128xf32>
    %13 = vector.extract_strided_slice %12 {offsets = [0, 0], sizes = [2, 128], strides = [1, 1]} : vector<8x128xf32> to vector<2x128xf32>
    %14 = vector.extract_strided_slice %12 {offsets = [2, 0], sizes = [2, 128], strides = [1, 1]} : vector<8x128xf32> to vector<2x128xf32>
    %15 = arith.addf %13, %14 : vector<2x128xf32>
    %16 = vector.extract_strided_slice %12 {offsets = [4, 0], sizes = [2, 128], strides = [1, 1]} : vector<8x128xf32> to vector<2x128xf32>
    %17 = arith.addf %15, %16 : vector<2x128xf32>
    %18 = vector.extract_strided_slice %12 {offsets = [6, 0], sizes = [2, 128], strides = [1, 1]} : vector<8x128xf32> to vector<2x128xf32>
    %19 = arith.addf %17, %18 : vector<2x128xf32>
    %cst_9 = arith.constant 2.500000e-01 : f32
    %20 = vector.broadcast %cst_9 : f32 to vector<2x128xf32>
    %21 = arith.mulf %19, %20 : vector<2x128xf32>
    %c0_10 = arith.constant 0 : index
    %c0_11 = arith.constant 0 : index
    %c0_12 = arith.constant 0 : index
    %c0_13 = arith.constant 0 : index
    %22 = vector.load %arg6[%c0_10, %c0_11, %c0_12, %c0_13] : memref<1x4x2x128xf32, #tpu.memory_space<vmem>>, vector<1x1x2x128xf32>
    %23 = vector.shape_cast %22 : vector<1x1x2x128xf32> to vector<2x128xf32>
    %24 = vector.shape_cast %21 : vector<2x128xf32> to vector<1x1x2x128xf32>
    tpu.vector_store %arg6[%c0_10, %c0_11, %c0_12, %c0_13], %24 {strides = array<i32>} : memref<1x4x2x128xf32, #tpu.memory_space<vmem>>, vector<1x1x2x128xf32>,
    %25 = arith.mulf %10#3, %11 : vector<8x128xf32>
    %26 = vector.extract_strided_slice %25 {offsets = [0, 0], sizes = [2, 128], strides = [1, 1]} : vector<8x128xf32> to vector<2x128xf32>
    %27 = vector.extract_strided_slice %25 {offsets = [2, 0], sizes = [2, 128], strides = [1, 1]} : vector<8x128xf32> to vector<2x128xf32>
    %28 = arith.addf %26, %27 : vector<2x128xf32>
    %29 = vector.extract_strided_slice %25 {offsets = [4, 0], sizes = [2, 128], strides = [1, 1]} : vector<8x128xf32> to vector<2x128xf32>
    %30 = arith.addf %28, %29 : vector<2x128xf32>
    %31 = vector.extract_strided_slice %25 {offsets = [6, 0], sizes = [2, 128], strides = [1, 1]} : vector<8x128xf32> to vector<2x128xf32>
    %32 = arith.addf %30, %31 : vector<2x128xf32>
    %cst_14 = arith.constant 2.500000e-01 : f32
    %33 = vector.broadcast %cst_14 : f32 to vector<2x128xf32>
    %34 = arith.mulf %32, %33 : vector<2x128xf32>
    %c0_15 = arith.constant 0 : index
    %c1 = arith.constant 1 : index
    %c0_16 = arith.constant 0 : index
    %c0_17 = arith.constant 0 : index
    %35 = vector.load %arg6[%c0_15, %c1, %c0_16, %c0_17] : memref<1x4x2x128xf32, #tpu.memory_space<vmem>>, vector<1x1x2x128xf32>
    %36 = vector.shape_cast %35 : vector<1x1x2x128xf32> to vector<2x128xf32>
    %37 = vector.shape_cast %34 : vector<2x128xf32> to vector<1x1x2x128xf32>
    tpu.vector_store %arg6[%c0_15, %c1, %c0_16, %c0_17], %37 {strides = array<i32>} : memref<1x4x2x128xf32, #tpu.memory_space<vmem>>, vector<1x1x2x128xf32>,
    %38 = arith.mulf %10#4, %11 : vector<8x128xf32>
    %39 = vector.extract_strided_slice %38 {offsets = [0, 0], sizes = [2, 128], strides = [1, 1]} : vector<8x128xf32> to vector<2x128xf32>
    %40 = vector.extract_strided_slice %38 {offsets = [2, 0], sizes = [2, 128], strides = [1, 1]} : vector<8x128xf32> to vector<2x128xf32>
    %41 = arith.addf %39, %40 : vector<2x128xf32>
    %42 = vector.extract_strided_slice %38 {offsets = [4, 0], sizes = [2, 128], strides = [1, 1]} : vector<8x128xf32> to vector<2x128xf32>
    %43 = arith.addf %41, %42 : vector<2x128xf32>
    %44 = vector.extract_strided_slice %38 {offsets = [6, 0], sizes = [2, 128], strides = [1, 1]} : vector<8x128xf32> to vector<2x128xf32>
    %45 = arith.addf %43, %44 : vector<2x128xf32>
    %cst_18 = arith.constant 2.500000e-01 : f32
    %46 = vector.broadcast %cst_18 : f32 to vector<2x128xf32>
    %47 = arith.mulf %45, %46 : vector<2x128xf32>
    %c0_19 = arith.constant 0 : index
    %c2 = arith.constant 2 : index
    %c0_20 = arith.constant 0 : index
    %c0_21 = arith.constant 0 : index
    %48 = vector.load %arg6[%c0_19, %c2, %c0_20, %c0_21] : memref<1x4x2x128xf32, #tpu.memory_space<vmem>>, vector<1x1x2x128xf32>
    %49 = vector.shape_cast %48 : vector<1x1x2x128xf32> to vector<2x128xf32>
    %50 = vector.shape_cast %47 : vector<2x128xf32> to vector<1x1x2x128xf32>
    tpu.vector_store %arg6[%c0_19, %c2, %c0_20, %c0_21], %50 {strides = array<i32>} : memref<1x4x2x128xf32, #tpu.memory_space<vmem>>, vector<1x1x2x128xf32>,
    %cst_22 = arith.constant 1.000000e+00 : f32
    %51 = vector.broadcast %cst_22 : f32 to vector<8x128xf32>
    %52 = arith.subf %51, %10#5 : vector<8x128xf32>
    %53 = vector.extract_strided_slice %52 {offsets = [0, 0], sizes = [2, 128], strides = [1, 1]} : vector<8x128xf32> to vector<2x128xf32>
    %54 = vector.extract_strided_slice %52 {offsets = [2, 0], sizes = [2, 128], strides = [1, 1]} : vector<8x128xf32> to vector<2x128xf32>
    %55 = arith.addf %53, %54 : vector<2x128xf32>
    %56 = vector.extract_strided_slice %52 {offsets = [4, 0], sizes = [2, 128], strides = [1, 1]} : vector<8x128xf32> to vector<2x128xf32>
    %57 = arith.addf %55, %56 : vector<2x128xf32>
    %58 = vector.extract_strided_slice %52 {offsets = [6, 0], sizes = [2, 128], strides = [1, 1]} : vector<8x128xf32> to vector<2x128xf32>
    %59 = arith.addf %57, %58 : vector<2x128xf32>
    %cst_23 = arith.constant 2.500000e-01 : f32
    %60 = vector.broadcast %cst_23 : f32 to vector<2x128xf32>
    %61 = arith.mulf %59, %60 : vector<2x128xf32>
    %c0_24 = arith.constant 0 : index
    %c3 = arith.constant 3 : index
    %c0_25 = arith.constant 0 : index
    %c0_26 = arith.constant 0 : index
    %62 = vector.load %arg6[%c0_24, %c3, %c0_25, %c0_26] : memref<1x4x2x128xf32, #tpu.memory_space<vmem>>, vector<1x1x2x128xf32>
    %63 = vector.shape_cast %62 : vector<1x1x2x128xf32> to vector<2x128xf32>
    %64 = vector.shape_cast %61 : vector<2x128xf32> to vector<1x1x2x128xf32>
    tpu.vector_store %arg6[%c0_24, %c3, %c0_25, %c0_26], %64 {strides = array<i32>} : memref<1x4x2x128xf32, #tpu.memory_space<vmem>>, vector<1x1x2x128xf32>,
    return
  }
  func.func @transform_0(%arg0: i32, %arg1: i32) -> i32 {
    %c0_i32 = arith.constant 0 : i32
    %c0_i32_0 = arith.constant 0 : i32
    return %c0_i32 : i32
  }
  func.func @transform_1(%arg0: i32, %arg1: i32) -> i32 {
    %c0_i32 = arith.constant 0 : i32
    %c0_i32_0 = arith.constant 0 : i32
    return %c0_i32 : i32
  }
  func.func @transform_2(%arg0: i32, %arg1: i32) -> (i32, i32) {
    %c0_i32 = arith.constant 0 : i32
    %c0_i32_0 = arith.constant 0 : i32
    return %arg1, %c0_i32 : i32, i32
  }
  func.func @transform_3(%arg0: i32, %arg1: i32) -> (i32, i32) {
    %c0_i32 = arith.constant 0 : i32
    %c0_i32_0 = arith.constant 0 : i32
    return %arg1, %c0_i32 : i32, i32
  }
  func.func @transform_4(%arg0: i32, %arg1: i32) -> (i32, i32, i32, i32) {
    %c0_i32 = arith.constant 0 : i32
    %c0_i32_0 = arith.constant 0 : i32
    %c0_i32_1 = arith.constant 0 : i32
    return %arg0, %c0_i32, %arg1, %c0_i32_0 : i32, i32, i32, i32
  }
}

</mosaic_0001>

<llo_original>
// kernel: tpu_custom_call.1
$region0: #{tpu_custom_call.1}
  #allocation0 [shape = 'u32[]', space=smem, size = 0x4, offset = 0x4, fixed_abs, tag = 'smem constant byte address 0x4 - core index']
  #allocation1 [shape = 'u32[72,128]{1,0:T(1,128)}', space=vmem, size = 0x9000, scoped, tag = 'internal scratch']
  %s0 = inlined_call_operand.hbm [shape: f32[216], index: 0, kind: input, shape index: {}]
  %s1 = inlined_call_operand.hbm [shape: f32[216], index: 1, kind: input, shape index: {}]
  %s2 = inlined_call_operand.hbm [shape: f32[8,128], index: 2, kind: input, shape index: {}]
  %s3 = inlined_call_operand.hbm [shape: f32[8,128], index: 3, kind: input, shape index: {}]
  %s4 = inlined_call_operand.hbm [shape: f32[2,4,2,128], index: 4, kind: output, shape index: {}]
  %s5 = sld [smem:[#allocation0]]
  $region72: #{tpu_custom_call.1} parent=0
    _
  %s7 = ssub.s32 1, %s5
  %s8 = scalar_select 0, %s7, %s5
  $region1: #{tpu_custom_call.1} parent=0
    #allocation2 [shape = 'u8[1024]{0}', space=smem, size = 0x400, scoped, tag = 'input window, operand 0, single buffered']
    #allocation3 [shape = 's32[2]{0}', space=sflag, size = 0x8, scoped, tag = 'scoped memory for tpu_custom_call.1']
    #allocation4 [shape = 's32[2]{0}', space=sflag, size = 0x8, scoped, tag = 'scoped memory for tpu_custom_call.1']
    #allocation5 [shape = 's32[2]{0}', space=sflag, size = 0x8, scoped, tag = 'scoped memory for tpu_custom_call.1']
    #allocation6 [shape = 'u8[1024]{0}', space=smem, size = 0x400, scoped, tag = 'input window, operand 1, single buffered']
    #allocation7 [shape = 's32[1]{0}', space=sflag, size = 0x4, scoped, tag = 'scoped memory for tpu_custom_call.1']
    #allocation8 [shape = 'u8[4096]{0}', space=vmem, size = 0x1000, scoped, tag = 'input window, operand 2, single buffered']
    #allocation9 [shape = 'u8[4096]{0}', space=vmem, size = 0x1000, scoped, tag = 'input window, operand 3, single buffered']
    #allocation10 [shape = 's32[1]{0}', space=sflag, size = 0x4, scoped, tag = 'scoped memory for tpu_custom_call.1']
    #allocation11 [shape = 'u8[8192]{0}', space=vmem, size = 0x2000, scoped, tag = 'output window, operand 0']
    %9 = vsyncpa [#allocation5], 0
    %10 = vsyncpa [#allocation7], 0
    %11 = vsyncpa [#allocation3], 0
    %12 = vsyncpa [#allocation10], 0
    %13 = vsyncpa [#allocation4], 0
    %s14 = scalar_lea.sflag [#allocation4], 1
    %15 = vsyncpa %s14, 0
    loop: start=0, step=1, limit=4
    $region2: #{tpu_custom_call.1} parent=1 // loop_pre_header
      _
    $region3: #{tpu_custom_call.1} parent=1 // loop_header
      %s17 = sphi 0, %s21
      %p18 = scmp.ge.s32.totalorder %s17, 4
      %s24 = sphi 0, %s36
      %s25 = sphi 0, %s32
      %s26 = sphi 0, %s24
      %s27 = sphi 0, %s25
      %s28 = sphi 0, %s26
      %s29 = sphi 0, %s27
      %s37 = sphi 0, %s37
      %s39 = sphi 0, %s37
      %s40 = sphi 0, %s39
      %s54 = sphi 0, %s40
      %s58 = sphi 0, %s58
      %s60 = sphi 0, %s58
      %s61 = sphi 0, %s60
      %s75 = sphi 0, %s61
      %s81 = sphi 0, %s83
      %s84 = sphi 0, %s81
      %s85 = sphi 0, %s84
      %s101 = sphi 0, %s85
      %s107 = sphi 0, %s109
      %s110 = sphi 0, %s107
      %s111 = sphi 0, %s110
      %s127 = sphi 0, %s111
      %s135 = sphi 0, %s137
      %s138 = sphi 0, %s135
      %s139 = sphi 0, %s138
      %s155 = sphi 0, %s139
    $region4: #{tpu_custom_call.1} parent=1 // loop_header_branch
      %20 = sbr.rel (%p18) target = $region8
    $region5: #{tpu_custom_call.1} parent=1 // loop_body
      %s22 = ssub.s32 %s17, 1
      %s23 = ssub.s32 %s17, 2
      %s30 = sadd.s32 1, %s25
      %p31 = scmp.ge.s32.totalorder %s30, 1
      %s32 = scalar_select %p31, 0, %s30
      %s33 = sadd.s32 1, %s24
      %s34 = scalar_select %p31, %s33, %s24
      %p35 = scmp.ge.s32.totalorder %s34, 2
      %s36 = scalar_select %p35, 0, %s34
      %s38 = sadd.s32 %s37, 1
      %p41 = scmp.eq.s32.totalorder %s17, 1
      %p42 = scmp.ne.s32.totalorder %s37, %s39
      %p43 = scmp.eq.s32.totalorder %s17, 0
      %p44 = por %p42, %p43
      %p45 = scmp.ne.s32.totalorder %s37, %s39
      %p46 = scmp.eq.s32.totalorder %s22, 1
      %p47 = por %p45, %p46
      %p48 = scmp.ne.s32.totalorder %s39, %s40
      %p49 = scmp.eq.s32.totalorder %s22, 0
      %p50 = por %p48, %p49
      %p51 = scmp.ne.s32.totalorder %s39, %s40
      %p52 = scmp.eq.s32.totalorder %s23, 1
      %p53 = por %p51, %p52
      %p55 = scmp.ne.s32.totalorder %s40, %s54
      %p56 = scmp.eq.s32.totalorder %s23, 0
      %p57 = por %p55, %p56
      %s59 = sadd.s32 %s58, 1
      %p62 = scmp.eq.s32.totalorder %s17, 1
      %p63 = scmp.ne.s32.totalorder %s58, %s60
      %p64 = scmp.eq.s32.totalorder %s17, 0
      %p65 = por %p63, %p64
      %p66 = scmp.ne.s32.totalorder %s58, %s60
      %p67 = scmp.eq.s32.totalorder %s22, 1
      %p68 = por %p66, %p67
      %p69 = scmp.ne.s32.totalorder %s60, %s61
      %p70 = scmp.eq.s32.totalorder %s22, 0
      %p71 = por %p69, %p70
      %p72 = scmp.ne.s32.totalorder %s60, %s61
      %p73 = scmp.eq.s32.totalorder %s23, 1
      %p74 = por %p72, %p73
      %p76 = scmp.ne.s32.totalorder %s61, %s75
      %p77 = scmp.eq.s32.totalorder %s23, 0
      %p78 = por %p76, %p77
      %s79 = ssub.s32 %s25, %s32
      %p80 = scmp.eq.s32.totalorder %s79, 0
      %s82 = sadd.s32 %s81, 1
      %s83 = scalar_select %p80, %s81, %s82
      %p86 = pneg %p80
      %p87 = scmp.eq.s32.totalorder %s17, 1
      %p88 = por %p86, %p87
      %p89 = scmp.ne.s32.totalorder %s81, %s84
      %p90 = scmp.eq.s32.totalorder %s17, 0
      %p91 = por %p89, %p90
      %p92 = scmp.ne.s32.totalorder %s81, %s84
      %p93 = scmp.eq.s32.totalorder %s22, 1
      %p94 = por %p92, %p93
      %p95 = scmp.ne.s32.totalorder %s84, %s85
      %p96 = scmp.eq.s32.totalorder %s22, 0
      %p97 = por %p95, %p96
      %p98 = scmp.ne.s32.totalorder %s84, %s85
      %p99 = scmp.eq.s32.totalorder %s23, 1
      %p100 = por %p98, %p99
      %p102 = scmp.ne.s32.totalorder %s85, %s101
      %p103 = scmp.eq.s32.totalorder %s23, 0
      %p104 = por %p102, %p103
      %s105 = ssub.s32 %s25, %s32
      %p106 = scmp.eq.s32.totalorder %s105, 0
      %s108 = sadd.s32 %s107, 1
      %s109 = scalar_select %p106, %s107, %s108
      %p112 = pneg %p106
      %p113 = scmp.eq.s32.totalorder %s17, 1
      %p114 = por %p112, %p113
      %p115 = scmp.ne.s32.totalorder %s107, %s110
      %p116 = scmp.eq.s32.totalorder %s17, 0
      %p117 = por %p115, %p116
      %p118 = scmp.ne.s32.totalorder %s107, %s110
      %p119 = scmp.eq.s32.totalorder %s22, 1
      %p120 = por %p118, %p119
      %p121 = scmp.ne.s32.totalorder %s110, %s111
      %p122 = scmp.eq.s32.totalorder %s22, 0
      %p123 = por %p121, %p122
      %p124 = scmp.ne.s32.totalorder %s110, %s111
      %p125 = scmp.eq.s32.totalorder %s23, 1
      %p126 = por %p124, %p125
      %p128 = scmp.ne.s32.totalorder %s111, %s127
      %p129 = scmp.eq.s32.totalorder %s23, 0
      %p130 = por %p128, %p129
      %s131 = ssub.s32 %s24, %s36
      %s132 = ssub.s32 %s25, %s32
      %s133 = sor.u32 %s131, %s132
      %p134 = scmp.eq.s32.totalorder %s133, 0
      %s136 = sadd.s32 %s135, 1
      %s137 = scalar_select %p134, %s135, %s136
      %p140 = pneg %p134
      %p141 = scmp.eq.s32.totalorder %s17, 1
      %p142 = por %p140, %p141
      %p143 = scmp.ne.s32.totalorder %s135, %s138
      %p144 = scmp.eq.s32.totalorder %s17, 0
      %p145 = por %p143, %p144
      %p146 = scmp.ne.s32.totalorder %s135, %s138
      %p147 = scmp.eq.s32.totalorder %s22, 1
      %p148 = por %p146, %p147
      %p149 = scmp.ne.s32.totalorder %s138, %s139
      %p150 = scmp.eq.s32.totalorder %s22, 0
      %p151 = por %p149, %p150
      %p152 = scmp.ne.s32.totalorder %s138, %s139
      %p153 = scmp.eq.s32.totalorder %s23, 1
      %p154 = por %p152, %p153
      %p156 = scmp.ne.s32.totalorder %s139, %s155
      %p157 = scmp.eq.s32.totalorder %s23, 0
      %p158 = por %p156, %p157
      %p159 = scmp.le.s32.totalorder 1, %s17
      %p160 = scmp.lt.s32.totalorder %s17, 3
      %p161 = pnand %p159, %p160
      %p162 = pneg %p161
      // Predicated region
      $region9: #{tpu_custom_call.1} parent=5 // pred_check
        _
      $region10: #{tpu_custom_call.1} parent=5 // pred_check_branch
        %164 = sbr.rel (%p161) target = $region12
      $region11: #{tpu_custom_call.1} parent=5 // pred_region
        %s165 = ssub.s32 %s17, 1
        // Predicated region
        $region13: #{tpu_custom_call.1} parent=11 // pred_check
          %p166 = pneg %p50
        $region14: #{tpu_custom_call.1} parent=11 // pred_check_branch
          %168 = sbr.rel (%p166) target = $region16
        $region15: #{tpu_custom_call.1} parent=11 // pred_region
          %170 = vsyncadd [#allocation5], 0
          %s172 = sshll.u32 %s0, 4
          %s173 = int_to_ptr.hbm [resolvable:$true] %s172
          %175 = dma.hbm_to_smem %s173, 32, [#allocation2], [#allocation5]
        $region16: #{tpu_custom_call.1} parent=11 // pred_fallthru
          _
        // Predicated region
        $region17: #{tpu_custom_call.1} parent=11 // pred_check
          %p176 = pneg %p71
        $region18: #{tpu_custom_call.1} parent=11 // pred_check_branch
          %178 = sbr.rel (%p176) target = $region20
        $region19: #{tpu_custom_call.1} parent=11 // pred_region
          %180 = vsyncadd [#allocation7], 0
          %s182 = sshll.u32 %s1, 4
          %s183 = int_to_ptr.hbm [resolvable:$true] %s182
          %185 = dma.hbm_to_smem %s183, 32, [#allocation6], [#allocation7]
        $region20: #{tpu_custom_call.1} parent=11 // pred_fallthru
          _
        // Predicated region
        $region21: #{tpu_custom_call.1} parent=11 // pred_check
          %p186 = pneg %p97
        $region22: #{tpu_custom_call.1} parent=11 // pred_check_branch
          %188 = sbr.rel (%p186) target = $region24
        $region23: #{tpu_custom_call.1} parent=11 // pred_region
          %190 = vsyncadd [#allocation3], 0
          %s191 = smul.addr %s27, 8
          %s192 = scalar_lea.hbm %s2, %s191
          %s194 = sshll.u32 %s192, 4
          %s195 = int_to_ptr.hbm [resolvable:$true] %s194
          %s196 = sshll.u32 [#allocation8], 4
          %s197 = int_to_ptr.vmem [resolvable:$true] %s196
          %199 = dma.hbm_to_vmem [thread:$0]  %s195, 128, %s197, [#allocation3]
        $region24: #{tpu_custom_call.1} parent=11 // pred_fallthru
          _
        // Predicated region
        $region25: #{tpu_custom_call.1} parent=11 // pred_check
          %p200 = pneg %p123
        $region26: #{tpu_custom_call.1} parent=11 // pred_check_branch
          %202 = sbr.rel (%p200) target = $region28
        $region27: #{tpu_custom_call.1} parent=11 // pred_region
          %204 = vsyncadd [#allocation10], 0
          %s205 = smul.addr %s27, 8
          %s206 = scalar_lea.hbm %s3, %s205
          %s208 = sshll.u32 %s206, 4
          %s209 = int_to_ptr.hbm [resolvable:$true] %s208
          %s210 = sshll.u32 [#allocation9], 4
          %s211 = int_to_ptr.vmem [resolvable:$true] %s210
          %213 = dma.hbm_to_vmem [thread:$0]  %s209, 128, %s211, [#allocation10]
        $region28: #{tpu_custom_call.1} parent=11 // pred_fallthru
          _
      $region12: #{tpu_custom_call.1} parent=5 // pred_fallthru
        _
      %p214 = scmp.lt.s32.totalorder %s17, 2
      // Predicated region
      $region29: #{tpu_custom_call.1} parent=5 // pred_check
        %p215 = pneg %p214
      $region30: #{tpu_custom_call.1} parent=5 // pred_check_branch
        %217 = sbr.rel (%p215) target = $region32
      $region31: #{tpu_custom_call.1} parent=5 // pred_region
        _
      $region32: #{tpu_custom_call.1} parent=5 // pred_fallthru
        _
      %p218 = scmp.le.s32.totalorder 1, %s17
      %p219 = scmp.lt.s32.totalorder %s17, 3
      %p220 = pnand %p218, %p219
      %p221 = pneg %p220
      // Predicated region
      $region33: #{tpu_custom_call.1} parent=5 // pred_check
        _
      $region34: #{tpu_custom_call.1} parent=5 // pred_check_branch
        %223 = sbr.rel (%p220) target = $region36
      $region35: #{tpu_custom_call.1} parent=5 // pred_region
        %s224 = ssub.s32 %s17, 1
        // Predicated region
        $region37: #{tpu_custom_call.1} parent=35 // pred_check
          %p225 = pneg %p50
        $region38: #{tpu_custom_call.1} parent=35 // pred_check_branch
          %227 = sbr.rel (%p225) target = $region40
        $region39: #{tpu_custom_call.1} parent=35 // pred_region
          %229 = dma.done [#allocation5], 32
        $region40: #{tpu_custom_call.1} parent=35 // pred_fallthru
          _
        // Predicated region
        $region41: #{tpu_custom_call.1} parent=35 // pred_check
          %p230 = pneg %p71
        $region42: #{tpu_custom_call.1} parent=35 // pred_check_branch
          %232 = sbr.rel (%p230) target = $region44
        $region43: #{tpu_custom_call.1} parent=35 // pred_region
          %234 = dma.done [#allocation7], 32
        $region44: #{tpu_custom_call.1} parent=35 // pred_fallthru
          _
        // Predicated region
        $region45: #{tpu_custom_call.1} parent=35 // pred_check
          %p235 = pneg %p97
        $region46: #{tpu_custom_call.1} parent=35 // pred_check_branch
          %237 = sbr.rel (%p235) target = $region48
        $region47: #{tpu_custom_call.1} parent=35 // pred_region
          %239 = dma.done [#allocation3], 128
        $region48: #{tpu_custom_call.1} parent=35 // pred_fallthru
          _
        // Predicated region
        $region49: #{tpu_custom_call.1} parent=35 // pred_check
          %p240 = pneg %p123
        $region50: #{tpu_custom_call.1} parent=35 // pred_check_branch
          %242 = sbr.rel (%p240) target = $region52
        $region51: #{tpu_custom_call.1} parent=35 // pred_region
          %244 = dma.done [#allocation10], 128
        $region52: #{tpu_custom_call.1} parent=35 // pred_fallthru
          _
        %245 = sfence
        %p246 = pneg %p50
        %p247 = pneg %p47
        %p248 = pneg %p71
        %p249 = pneg %p68
        %p250 = pneg %p97
        %p251 = pneg %p94
        %p252 = pneg %p123
        %p253 = pneg %p120
        %p254 = pneg %p151
        %p255 = pneg %p148
        %s256 = sand.u32 %s138, 1
        %s257 = scalar_lea.sflag [#allocation4], %s256
        %s258 = sand.u32 %s138, 1
        %s259 = smul.addr %s258, 8
        %s260 = scalar_lea.vmem [#allocation11], %s259
        %v261 = vld [vmem:[#allocation8] sm:$0xff]
        %v262 = vld [vmem:[#allocation9] sm:$0xff]
        %s263 = smul.u32 %s26, 108
        loop: start=0, step=1, limit=12
        $region53: #{tpu_custom_call.1} parent=35 // loop_pre_header
          _
        $region54: #{tpu_custom_call.1} parent=35 // loop_header
          %s265 = sphi 0, %s269
          %p266 = scmp.ge.s32.totalorder %s265, 12
          %v270 = vphi 0.001, %v562
          %v271 = vphi 1.0, %v598
          %v272 = vphi 0.0, %v601
          %v273 = vphi 0.0, %v604
          %v274 = vphi 0.0, %v607
          %v275 = vphi 1.0, %v609
        $region55: #{tpu_custom_call.1} parent=35 // loop_header_branch
          %268 = sbr.rel (%p266) target = $region59
        $region56: #{tpu_custom_call.1} parent=35 // loop_body
          %s276 = smul.u32 %s265, 9
          %s277 = sadd.s32 %s263, %s276
          %s278 = sld [smem:[#allocation2 + %s277]]
          %s279 = sadd.s32 %s277, 1
          %s280 = sld [smem:[#allocation2 + %s279]]
          %s281 = sadd.s32 %s277, 2
          %s282 = sld [smem:[#allocation2 + %s281]]
          %s283 = sadd.s32 %s277, 3
          %s284 = sld [smem:[#allocation2 + %s283]]
          %s285 = sadd.s32 %s277, 4
          %s286 = sld [smem:[#allocation2 + %s285]]
          %s287 = sadd.s32 %s277, 5
          %s288 = sld [smem:[#allocation2 + %s287]]
          %s289 = sadd.s32 %s277, 6
          %s290 = sld [smem:[#allocation2 + %s289]]
          %s291 = sadd.s32 %s277, 7
          %s292 = sld [smem:[#allocation2 + %s291]]
          %s293 = sadd.s32 %s277, 8
          %s294 = sld [smem:[#allocation2 + %s293]]
          %s295 = sld [smem:[#allocation6 + %s277]]
          %s296 = sld [smem:[#allocation6 + %s279]]
          %s297 = sld [smem:[#allocation6 + %s281]]
          %s298 = sld [smem:[#allocation6 + %s283]]
          %s299 = sld [smem:[#allocation6 + %s285]]
          %s300 = sld [smem:[#allocation6 + %s287]]
          %s301 = sld [smem:[#allocation6 + %s289]]
          %s302 = sld [smem:[#allocation6 + %s291]]
          %s303 = sld [smem:[#allocation6 + %s293]]
          %s304 = ssub.f32 %s284, %s278
          %s305 = ssub.f32 %s286, %s280
          %s306 = ssub.f32 %s290, %s284
          %s307 = ssub.f32 %s292, %s286
          %s308 = ssub.f32 %s278, %s290
          %s309 = ssub.f32 %s280, %s292
          %s310 = smul.f32 %s304, %s304
          %s311 = smul.f32 %s305, %s305
          %s312 = sadd.f32 %s310, %s311
          %s313 = sadd.f32 %s312, 1e-12
          %v314 = vstv %s313
          %v315 = vrcp.pop %v314
          %v316 = vmul.f32 %v314, %v315
          %v317 = vsub.f32 1.0, %v316
          %v318 = vmul.f32 %v315, %v317
          %v319 = vadd.f32 %v315, %v318
          %vm320 = vweird.f32 %v314
          %vm321 = vweird.f32 %v315
          %vm322 = vmor %vm320, %vm321
          %v323 = vsel %vm322, %v315, %v319
          %v324 = vand.u32 2147483647, %v314
          %vm325 = vcmp.eq.f32.partialorder %v324, 8.507059e+37
          %v326 = vand.u32 %v314, 2147483648
          %v327 = vor.u32 1.1754944e-38, %v326
          %v328 = vsel %vm325, %v327, %v323
          %s329 = vtos %v328
          %s330 = smul.f32 %s306, %s306
          %s331 = smul.f32 %s307, %s307
          %s332 = sadd.f32 %s330, %s331
          %s333 = sadd.f32 %s332, 1e-12
          %v334 = vstv %s333
          %v335 = vrcp.pop %v334
          %v336 = vmul.f32 %v334, %v335
          %v337 = vsub.f32 1.0, %v336
          %v338 = vmul.f32 %v335, %v337
          %v339 = vadd.f32 %v335, %v338
          %vm340 = vweird.f32 %v334
          %vm341 = vweird.f32 %v335
          %vm342 = vmor %vm340, %vm341
          %v343 = vsel %vm342, %v335, %v339
          %v344 = vand.u32 2147483647, %v334
          %vm345 = vcmp.eq.f32.partialorder %v344, 8.507059e+37
          %v346 = vand.u32 %v334, 2147483648
          %v347 = vor.u32 1.1754944e-38, %v346
          %v348 = vsel %vm345, %v347, %v343
          %s349 = vtos %v348
          %s350 = smul.f32 %s308, %s308
          %s351 = smul.f32 %s309, %s309
          %s352 = sadd.f32 %s350, %s351
          %s353 = sadd.f32 %s352, 1e-12
          %v354 = vstv %s353
          %v355 = vrcp.pop %v354
          %v356 = vmul.f32 %v354, %v355
          %v357 = vsub.f32 1.0, %v356
          %v358 = vmul.f32 %v355, %v357
          %v359 = vadd.f32 %v355, %v358
          %vm360 = vweird.f32 %v354
          %vm361 = vweird.f32 %v355
          %vm362 = vmor %vm360, %vm361
          %v363 = vsel %vm362, %v355, %v359
          %v364 = vand.u32 2147483647, %v354
          %vm365 = vcmp.eq.f32.partialorder %v364, 8.507059e+37
          %v366 = vand.u32 %v354, 2147483648
          %v367 = vor.u32 1.1754944e-38, %v366
          %v368 = vsel %vm365, %v367, %v363
          %s369 = vtos %v368
          %s370 = ssub.f32 %s286, %s292
          %s371 = smul.f32 %s370, %s308
          %s372 = smul.f32 %s306, %s309
          %s373 = sadd.f32 %s371, %s372
          %p374 = scmp.ge.f32.partialorder %s373, 0.0
          %s375 = scalar_select %p374, 1e-10, -1e-10
          %s376 = sadd.f32 %s373, %s375
          %v377 = vstv %s376
          %v378 = vrcp.pop %v377
          %v379 = vmul.f32 %v377, %v378
          %v380 = vsub.f32 1.0, %v379
          %v381 = vmul.f32 %v378, %v380
          %v382 = vadd.f32 %v378, %v381
          %vm383 = vweird.f32 %v377
          %vm384 = vweird.f32 %v378
          %vm385 = vmor %vm383, %vm384
          %v386 = vsel %vm385, %v378, %v382
          %v387 = vand.u32 2147483647, %v377
          %vm388 = vcmp.eq.f32.partialorder %v387, 8.507059e+37
          %v389 = vand.u32 %v377, 2147483648
          %v390 = vor.u32 1.1754944e-38, %v389
          %v391 = vsel %vm388, %v390, %v386
          %s392 = vtos %v391
          %v393 = vstv %s282
          %v394 = vrcp.pop %v393
          %v395 = vmul.f32 %v393, %v394
          %v396 = vsub.f32 1.0, %v395
          %v397 = vmul.f32 %v394, %v396
          %v398 = vadd.f32 %v394, %v397
          %vm399 = vweird.f32 %v393
          %vm400 = vweird.f32 %v394
          %vm401 = vmor %vm399, %vm400
          %v402 = vsel %vm401, %v394, %v398
          %v403 = vand.u32 2147483647, %v393
          %vm404 = vcmp.eq.f32.partialorder %v403, 8.507059e+37
          %v405 = vand.u32 %v393, 2147483648
          %v406 = vor.u32 1.1754944e-38, %v405
          %v407 = vsel %vm404, %v406, %v402
          %s408 = vtos %v407
          %v409 = vstv %s288
          %v410 = vrcp.pop %v409
          %v411 = vmul.f32 %v409, %v410
          %v412 = vsub.f32 1.0, %v411
          %v413 = vmul.f32 %v410, %v412
          %v414 = vadd.f32 %v410, %v413
          %vm415 = vweird.f32 %v409
          %vm416 = vweird.f32 %v410
          %vm417 = vmor %vm415, %vm416
          %v418 = vsel %vm417, %v410, %v414
          %v419 = vand.u32 2147483647, %v409
          %vm420 = vcmp.eq.f32.partialorder %v419, 8.507059e+37
          %v421 = vand.u32 %v409, 2147483648
          %v422 = vor.u32 1.1754944e-38, %v421
          %v423 = vsel %vm420, %v422, %v418
          %s424 = vtos %v423
          %v425 = vstv %s294
          %v426 = vrcp.pop %v425
          %v427 = vmul.f32 %v425, %v426
          %v428 = vsub.f32 1.0, %v427
          %v429 = vmul.f32 %v426, %v428
          %v430 = vadd.f32 %v426, %v429
          %vm431 = vweird.f32 %v425
          %vm432 = vweird.f32 %v426
          %vm433 = vmor %vm431, %vm432
          %v434 = vsel %vm433, %v426, %v430
          %v435 = vand.u32 2147483647, %v425
          %vm436 = vcmp.eq.f32.partialorder %v435, 8.507059e+37
          %v437 = vand.u32 %v425, 2147483648
          %v438 = vor.u32 1.1754944e-38, %v437
          %v439 = vsel %vm436, %v438, %v434
          %s440 = vtos %v439
          %v441 = vstv %s278
          %v442 = vsub.f32 %v261, %v441
          %v443 = vstv %s280
          %v444 = vsub.f32 %v262, %v443
          %v445 = vstv %s284
          %v446 = vsub.f32 %v261, %v445
          %v447 = vstv %s286
          %v448 = vsub.f32 %v262, %v447
          %v449 = vstv %s290
          %v450 = vsub.f32 %v261, %v449
          %v451 = vstv %s292
          %v452 = vsub.f32 %v262, %v451
          %v453 = vstv %s304
          %v454 = vmul.f32 %v442, %v453
          %v455 = vstv %s305
          %v456 = vmul.f32 %v444, %v455
          %v457 = vadd.f32 %v454, %v456
          %v458 = vstv %s329
          %v459 = vmul.f32 %v457, %v458
          %v460 = vmax.f32 %v459, 0.0
          %v461 = vmin.f32 %v460, 1.0
          %v462 = vmul.f32 %v461, %v453
          %v463 = vsub.f32 %v442, %v462
          %v464 = vmul.f32 %v461, %v455
          %v465 = vsub.f32 %v444, %v464
          %v466 = vmul.f32 %v463, %v463
          %v467 = vmul.f32 %v465, %v465
          %v468 = vadd.f32 %v466, %v467
          %v469 = vstv %s306
          %v470 = vmul.f32 %v446, %v469
          %v471 = vstv %s307
          %v472 = vmul.f32 %v448, %v471
          %v473 = vadd.f32 %v470, %v472
          %v474 = vstv %s349
          %v475 = vmul.f32 %v473, %v474
          %v476 = vmax.f32 %v475, 0.0
          %v477 = vmin.f32 %v476, 1.0
          %v478 = vmul.f32 %v477, %v469
          %v479 = vsub.f32 %v446, %v478
          %v480 = vmul.f32 %v477, %v471
          %v481 = vsub.f32 %v448, %v480
          %v482 = vmul.f32 %v479, %v479
          %v483 = vmul.f32 %v481, %v481
          %v484 = vadd.f32 %v482, %v483
          %v485 = vmin.f32 %v468, %v484
          %v486 = vstv %s308
          %v487 = vmul.f32 %v450, %v486
          %v488 = vstv %s309
          %v489 = vmul.f32 %v452, %v488
          %v490 = vadd.f32 %v487, %v489
          %v491 = vstv %s369
          %v492 = vmul.f32 %v490, %v491
          %v493 = vmax.f32 %v492, 0.0
          %v494 = vmin.f32 %v493, 1.0
          %v495 = vmul.f32 %v494, %v486
          %v496 = vsub.f32 %v450, %v495
          %v497 = vmul.f32 %v494, %v488
          %v498 = vsub.f32 %v452, %v497
          %v499 = vmul.f32 %v496, %v496
          %v500 = vmul.f32 %v498, %v498
          %v501 = vadd.f32 %v499, %v500
          %v502 = vmin.f32 %v485, %v501
          %v503 = vstv %s370
          %v504 = vmul.f32 %v503, %v450
          %v505 = vmul.f32 %v469, %v452
          %v506 = vadd.f32 %v504, %v505
          %v507 = vstv %s392
          %v508 = vmul.f32 %v506, %v507
          %s509 = ssub.f32 %s292, %s280
          %v510 = vstv %s509
          %v511 = vmul.f32 %v510, %v450
          %v512 = vmul.f32 %v486, %v452
          %v513 = vadd.f32 %v511, %v512
          %v514 = vmul.f32 %v513, %v507
          %v515 = vsub.f32 1.0, %v508
          %v516 = vsub.f32 %v515, %v514
          %vm517 = vcmp.ge.f32.partialorder %v508, 0.0
          %vm518 = vcmp.ge.f32.partialorder %v514, 0.0
          %vm519 = vmand %vm517, %vm518
          %vm520 = vcmp.ge.f32.partialorder %v516, 0.0
          %vm521 = vmand %vm519, %vm520
          %vm522 = vcmp.lt.f32.partialorder %v502, 1e-09
          %vm523 = vmor %vm521, %vm522
          %v524 = vsel %vm521, 1.0, -1.0
          %v525 = vmul.f32 %v524, %v502
          %v526 = vmul.f32 %v525, 100000.0
          %v527 = vmul.f32 %v526, 0.5
          %v528 = vtanh.pop %v527
          %v529 = vadd.f32 %v528, 1.0
          %v530 = vmul.f32 %v529, 0.5
          %v531 = vsel %vm523, %v530, 0.0
          %v532 = vmax.f32 %v508, 0.0
          %v533 = vmin.f32 %v532, 1.0
          %v534 = vmax.f32 %v514, 0.0
          %v535 = vmin.f32 %v534, 1.0
          %v536 = vmax.f32 %v516, 0.0
          %v537 = vmin.f32 %v536, 1.0
          %v538 = vadd.f32 %v533, %v535
          %v539 = vadd.f32 %v538, %v537
          %v540 = vmax.f32 %v539, 1e-05
          %v541 = vrcp.pop %v540
          %v542 = vmul.f32 %v533, %v541
          %v543 = vmul.f32 %v535, %v541
          %v544 = vmul.f32 %v537, %v541
          %v545 = vstv %s408
          %v546 = vmul.f32 %v542, %v545
          %v547 = vstv %s424
          %v548 = vmul.f32 %v543, %v547
          %v549 = vadd.f32 %v546, %v548
          %v550 = vstv %s440
          %v551 = vmul.f32 %v544, %v550
          %v552 = vadd.f32 %v549, %v551
          %v553 = vrcp.pop %v552
          %vm554 = vcmp.gt.f32.partialorder %v553, 0.05
          %vm555 = vmand %vm523, %vm554
          %vm556 = vcmp.lt.f32.partialorder %v553, 100.0
          %vm557 = vmand %vm555, %vm556
          %v558 = vsub.f32 100.0, %v553
          %v559 = vmul.f32 %v558, 0.010005003
          %v560 = vsel %vm557, %v559, 0.0
          %v561 = vmax.f32 %v270, %v560
          %v562 = vsel %vm557, %v561, %v270
          %v563 = vsub.f32 %v270, %v562
          %v564 = vmul.f32 %v563, 10000.0
          %v565 = vmul.f32 %v564, 1.442695
          %v566 = vpow.pop %v565
          %v567 = vsub.f32 %v560, %v562
          %v568 = vmul.f32 %v567, 10000.0
          %v569 = vmul.f32 %v568, 1.442695
          %v570 = vpow.pop %v569
          %v571 = vsel %vm557, %v570, 0.0
          %v572 = vmul.f32 %v571, %v531
          %v573 = vstv %s295
          %v574 = vmul.f32 %v542, %v573
          %v575 = vstv %s298
          %v576 = vmul.f32 %v543, %v575
          %v577 = vadd.f32 %v574, %v576
          %v578 = vstv %s301
          %v579 = vmul.f32 %v544, %v578
          %v580 = vadd.f32 %v577, %v579
          %v581 = vstv %s296
          %v582 = vmul.f32 %v542, %v581
          %v583 = vstv %s299
          %v584 = vmul.f32 %v543, %v583
          %v585 = vadd.f32 %v582, %v584
          %v586 = vstv %s302
          %v587 = vmul.f32 %v544, %v586
          %v588 = vadd.f32 %v585, %v587
          %v589 = vstv %s297
          %v590 = vmul.f32 %v542, %v589
          %v591 = vstv %s300
          %v592 = vmul.f32 %v543, %v591
          %v593 = vadd.f32 %v590, %v592
          %v594 = vstv %s303
          %v595 = vmul.f32 %v544, %v594
          %v596 = vadd.f32 %v593, %v595
          %v597 = vmul.f32 %v271, %v566
          %v598 = vadd.f32 %v597, %v572
          %v599 = vmul.f32 %v272, %v566
          %v600 = vmul.f32 %v572, %v580
          %v601 = vadd.f32 %v599, %v600
          %v602 = vmul.f32 %v273, %v566
          %v603 = vmul.f32 %v572, %v588
          %v604 = vadd.f32 %v602, %v603
          %v605 = vmul.f32 %v274, %v566
          %v606 = vmul.f32 %v572, %v596
          %v607 = vadd.f32 %v605, %v606
          %v608 = vsub.f32 1.0, %v531
          %v609 = vmul.f32 %v275, %v608
        $region57: #{tpu_custom_call.1} parent=35 // loop_footer
          %s269 = sadd.s32 1, %s265
        $region58: #{tpu_custom_call.1} parent=35 // loop_footer_branch
          %264 = sbr.rel target = $region54
        $region59: #{tpu_custom_call.1} parent=35 // loop_exit
          _
        %v610 = vrcp.pop %v271
        %v611 = vmul.f32 %v272, %v610
        %v613 = vrot.slane %v611, 2
        %v615 = vadd.f32 %v611, %v613
        %v616 = vrot.slane %v611, 4
        %v618 = vadd.f32 %v615, %v616
        %v619 = vrot.slane %v611, 6
        %v621 = vadd.f32 %v618, %v619
        %v622 = vmul.f32 %v621, 0.25
        %623 = vst [vmem:[%s260] sm:$0x3] %v622
        %v624 = vmul.f32 %v273, %v610
        %v626 = vrot.slane %v624, 2
        %v628 = vadd.f32 %v624, %v626
        %v629 = vrot.slane %v624, 4
        %v631 = vadd.f32 %v628, %v629
        %v632 = vrot.slane %v624, 6
        %v634 = vadd.f32 %v631, %v632
        %v635 = vmul.f32 %v634, 0.25
        %s636 = scalar_lea.vmem %s260, 2 [#allocation11]
        %637 = vst [vmem:[%s636] sm:$0x3] %v635
        %v638 = vmul.f32 %v274, %v610
        %v640 = vrot.slane %v638, 2
        %v642 = vadd.f32 %v638, %v640
        %v643 = vrot.slane %v638, 4
        %v645 = vadd.f32 %v642, %v643
        %v646 = vrot.slane %v638, 6
        %v648 = vadd.f32 %v645, %v646
        %v649 = vmul.f32 %v648, 0.25
        %s650 = scalar_lea.vmem %s260, 4 [#allocation11]
        %651 = vst [vmem:[%s650] sm:$0x3] %v649
        %v652 = vsub.f32 1.0, %v275
        %v654 = vrot.slane %v652, 2
        %v656 = vadd.f32 %v652, %v654
        %v657 = vrot.slane %v652, 4
        %v659 = vadd.f32 %v656, %v657
        %v660 = vrot.slane %v652, 6
        %v662 = vadd.f32 %v659, %v660
        %v663 = vmul.f32 %v662, 0.25
        %s664 = scalar_lea.vmem %s260, 6 [#allocation11]
        %665 = vst [vmem:[%s664] sm:$0x3] %v663
        %s666 = sand.u32 %s138, 1
        %s667 = scalar_lea.sflag [#allocation4], %s666
        %s668 = sand.u32 %s138, 1
        %s669 = smul.addr %s668, 8
        %s670 = scalar_lea.vmem [#allocation11], %s669
        // Predicated region
        $region60: #{tpu_custom_call.1} parent=35 // pred_check
          %p671 = pneg %p148
        $region61: #{tpu_custom_call.1} parent=35 // pred_check_branch
          %673 = sbr.rel (%p671) target = $region63
        $region62: #{tpu_custom_call.1} parent=35 // pred_region
          %675 = vsyncadd %s667, 0
          %s676 = smul.addr %s26, 4
          %s677 = sadd.s32 %s27, %s676
          %s678 = smul.addr %s677, 2
          %s679 = scalar_lea.hbm %s4, %s678
          %s680 = sshll.u32 %s670, 4
          %s681 = int_to_ptr.vmem [resolvable:$true] %s680
          %s682 = sshll.u32 %s679, 4
          %s683 = int_to_ptr.hbm [resolvable:$true] %s682
          %688 = dma.vmem_to_hbm [thread:$0]  %s681, 128, %s683, %s667, 32, 32, 2
        $region63: #{tpu_custom_call.1} parent=35 // pred_fallthru
          _
      $region36: #{tpu_custom_call.1} parent=5 // pred_fallthru
        _
      %p689 = scmp.le.s32.totalorder 2, %s17
      // Predicated region
      $region64: #{tpu_custom_call.1} parent=5 // pred_check
        %p690 = pneg %p689
      $region65: #{tpu_custom_call.1} parent=5 // pred_check_branch
        %692 = sbr.rel (%p690) target = $region67
      $region66: #{tpu_custom_call.1} parent=5 // pred_region
        %s693 = ssub.s32 %s17, 2
        // Predicated region
        $region68: #{tpu_custom_call.1} parent=66 // pred_check
          %p694 = pneg %p154
        $region69: #{tpu_custom_call.1} parent=66 // pred_check_branch
          %696 = sbr.rel (%p694) target = $region71
        $region70: #{tpu_custom_call.1} parent=66 // pred_region
          %s697 = sand.u32 %s139, 1
          %s698 = scalar_lea.sflag [#allocation4], %s697
          %s699 = sand.u32 %s139, 1
          %s700 = smul.addr %s699, 8
          %s701 = scalar_lea.vmem [#allocation11], %s700
          %703 = dma.done %s698, 128
        $region71: #{tpu_custom_call.1} parent=66 // pred_fallthru
          _
      $region67: #{tpu_custom_call.1} parent=5 // pred_fallthru
        _
    $region6: #{tpu_custom_call.1} parent=1 // loop_footer
      %s21 = sadd.s32 1, %s17
    $region7: #{tpu_custom_call.1} parent=1 // loop_footer_branch
      %16 = sbr.rel target = $region3
    $region8: #{tpu_custom_call.1} parent=1 // loop_exit
      _
    %704 = vsyncpa [#allocation3], 1
    %s705 = scalar_lea.sflag [#allocation3], 1
    %706 = vsyncpa %s705, 1
    %707 = vsyncpa [#allocation10], 1
    %708 = vsyncpa [#allocation4], 1
    %s709 = scalar_lea.sflag [#allocation4], 1
    %710 = vsyncpa %s709, 1
    %711 = vsyncpa [#allocation5], 1
    %s712 = scalar_lea.sflag [#allocation5], 1
    %713 = vsyncpa %s712, 1
    %714 = vsyncpa [#allocation7], 1

</llo_original>
